<compile_context>
chip_gen: v6e
topology: v6e:2x2x1
jax: 0.10.0
libtpu: 0.0.40
codegen_flags: <defaults>
</compile_context>

<pallas_src>
import jax
import jax.numpy as jnp
from jax.experimental import pallas as pl
from jax.experimental.pallas import tpu as pltpu


def _round_up(x, m):
    return ((x + m - 1) // m) * m


def _sparse_linear_kernel(idx_ref, w_ref, emb_ref, out_ref, acc_ref):
    # idx_ref : VMEM (Bt, N)  int32    bag indices for this batch tile
    # w_ref   : VMEM (Bt, N)  float32  bag weights for this batch tile
    # emb_ref : VMEM (Vt, D)  table    current vocabulary tile (native dtype)
    # out_ref : VMEM (Bt, D)  float32  output tile (written at last V step)
    # acc_ref : VMEM (Bt, D)  float32  resident accumulator scratch
    k = pl.program_id(1)

    @pl.when(k == 0)
    def _():
        acc_ref[...] = jnp.zeros_like(acc_ref)

    bt, n = idx_ref.shape
    v_tile = emb_ref.shape[0]
    v_base = k * v_tile

    # Global vocab id of each column of this table tile (hoisted out of loop).
    iota_bv = jax.lax.broadcasted_iota(jnp.int32, (bt, v_tile), 1) + v_base

    # Scatter bag weights: S[b, v] = sum_n w[b, n] * (idx[b, n] == v),
    # accumulated column-by-column so no (Bt, N, Vt) intermediate is ever live.
    # Duplicated indices sum their weights (== gather+sum, by linearity); the
    # padding index 0 just selects the zeroed row 0 of the table; indices that
    # fall outside this V tile (or outside the vocab) contribute nothing.
    def body(j, s):
        idx_j = idx_ref[:, pl.ds(j, 1)]            # (Bt, 1) int32
        w_j = w_ref[:, pl.ds(j, 1)]                # (Bt, 1) f32
        return s + jnp.where(idx_j == iota_bv, w_j, jnp.float32(0.0))

    s = jax.lax.fori_loop(
        0, n, body, jnp.zeros((bt, v_tile), jnp.float32), unroll=True)

    # Weighted bag reduction as a dense MXU matmul in the table's native dtype
    # (bf16 table -> native bf16 MXU path), accumulating in f32.
    tbl = emb_ref[...]
    acc_ref[...] += jnp.dot(s.astype(tbl.dtype), tbl,
                            preferred_element_type=jnp.float32)

    @pl.when(k == pl.num_programs(1) - 1)
    def _():
        out_ref[...] = acc_ref[...].astype(out_ref.dtype)


def _vmem_capacity_bytes(default=64 << 20):
    """Best-effort per-generation VMEM capacity; conservative fallback (v7x)."""
    try:
        info = pltpu.get_tpu_info()
        for attr in ("vmem_capacity_bytes", "vmem_bytes", "vmem_size_bytes"):
            cap = getattr(info, attr, None)
            if cap:
                return int(cap)
    except Exception:
        pass
    return default


def sparse_linear(x, emb_table, *, b_tile_max=128, v_tile_max=1024):
    """Forward pass of SparseLinear.

    x: (B, N, 2) float array packing (index, weight), OR a tuple (index, weight).
    emb_table: (V, D) embedding table (row 0 = padding row, expected zero).
      Any float dtype; bf16 recommended (native MXU path, half the VMEM/HBM).
    """
    if isinstance(x, tuple):
        index, weight = x
    else:
        index = x[:, :, 0]
        weight = x[:, :, 1]
    index = index.astype(jnp.int32)        # torch .long() truncation semantics
    weight = weight.astype(jnp.float32)

    B, N = index.shape
    V, D = emb_table.shape
    tbl_itemsize = jnp.dtype(emb_table.dtype).itemsize

    # Batch tiling: sublane-aligned, as large as possible (<= b_tile_max), but
    # aim for >= 2 grid steps so both v7x TensorCores get work on big batches.
    b_tile = max(8, min(b_tile_max, _round_up(-(-B // 2), 8)))
    b_pad = _round_up(B, b_tile)
    if b_pad != B:
        index = jnp.pad(index, ((0, b_pad - B), (0, 0)))
        weight = jnp.pad(weight, ((0, b_pad - B), (0, 0)))

    # Vocabulary tiling: stream (v_tile, D) table blocks over the last
    # ("arbitrary") grid axis; accumulate into a resident f32 scratch.
    v_tile = min(v_tile_max, _round_up(V, 8))
    v_pad = _round_up(V, v_tile)
    if v_pad != V:
        # Zero padding rows; no index ever points at them, so they are inert.
        emb_table = jnp.pad(emb_table, ((0, v_pad - V), (0, 0)))

    grid = (b_pad // b_tile, v_pad // v_tile)

    # VMEM budget: BlockSpec inputs/outputs are double-buffered.
    needed = (
        2 * v_tile * D * tbl_itemsize        # table blocks (double-buffered)
        + 2 * 2 * b_tile * N * 4             # idx + weight blocks
        + 2 * b_tile * D * 4                 # output blocks
        + b_tile * D * 4                     # accumulator scratch
        + 2 * b_tile * v_tile * 4            # S + matmul staging headroom
        + (4 << 20)                          # misc compiler scratch headroom
    )
    vmem_limit = int(min(max(needed, 16 << 20),
                         int(0.85 * _vmem_capacity_bytes())))

    cost = pl.CostEstimate(
        flops=int(2 * b_pad * v_pad * D + 3 * b_pad * N * v_pad),
        transcendentals=0,
        bytes_accessed=int((b_pad // b_tile) * v_pad * D * tbl_itemsize
                           + b_pad * N * 8 + b_pad * D * 4),
    )

    out = pl.pallas_call(
        _sparse_linear_kernel,
        out_shape=jax.ShapeDtypeStruct((b_pad, D), jnp.float32),
        grid_spec=pltpu.PrefetchScalarGridSpec(
            num_scalar_prefetch=0,
            grid=grid,
            in_specs=[
                pl.BlockSpec((b_tile, N), lambda i, k: (i, 0)),   # indices
                pl.BlockSpec((b_tile, N), lambda i, k: (i, 0)),   # weights
                pl.BlockSpec((v_tile, D), lambda i, k: (k, 0)),   # table tile
            ],
            out_specs=pl.BlockSpec((b_tile, D), lambda i, k: (i, 0)),
            scratch_shapes=[pltpu.VMEM((b_tile, D), jnp.float32)],
        ),
        compiler_params=pltpu.CompilerParams(
            dimension_semantics=("parallel", "arbitrary"),
            vmem_limit_bytes=vmem_limit,
        ),
        cost_estimate=cost,
    )(index, weight, emb_table)

    out = out[:B]
    return jnp.squeeze(out)      # torch .squeeze(): drop any size-1 dims


def make_embedding(key, input_size, output_size, dtype=jnp.float32):
    """nn.Embedding default init: N(0, 1); padding_idx=0 row zeroed."""
    tbl = jax.random.normal(key, (input_size, output_size), dtype=jnp.float32)
    tbl = tbl.at[0].set(0.0)
    return tbl.astype(dtype)


if __name__ == "__main__":
    B, N = 32, 8          # batch, bag size
    V, D = 256, 128       # input_size (vocab), output_size (embedding dim)

    key = jax.random.PRNGKey(0)
    k_emb, k_idx, k_w = jax.random.split(key, 3)

    emb_f32 = make_embedding(k_emb, V, D, dtype=jnp.float32)

    index = jax.random.randint(k_idx, (B, N), 0, V).astype(jnp.int32)
    index = index.at[:, -1].set(0)            # sprinkle padding indices
    weight = jax.random.normal(k_w, (B, N), dtype=jnp.float32)

    # PyTorch-style packed input: x[:,:,0]=index (as float), x[:,:,1]=weight
    x = jnp.stack([index.astype(jnp.float32), weight], axis=-1)   # (B, N, 2)

    # Pure-JAX reference.
    ref = jnp.squeeze(jnp.einsum("bn,bnd->bd", weight, emb_f32[index]))

    # 1) f32 table, single V tile.
    out = jax.block_until_ready(sparse_linear(x, emb_f32))
    assert out.shape == ref.shape, (out.shape, ref.shape)
    assert jnp.allclose(out, ref, atol=1e-4, rtol=1e-4), "f32 mismatch"

    # 2) f32 table, forced V tiling (exercises the streaming accumulator path).
    out_vt = jax.block_until_ready(sparse_linear(x, emb_f32, v_tile_max=128))
    assert jnp.allclose(out_vt, ref, atol=1e-4, rtol=1e-4), "v-tiled mismatch"

    # 3) bf16 table (native MXU path, f32 accumulation) — looser tolerance.
    out_bf16 = jax.block_until_ready(
        sparse_linear(x, emb_f32.astype(jnp.bfloat16)))
    assert jnp.allclose(out_bf16, ref, atol=0.25, rtol=0.05), "bf16 mismatch"

    print("KERNEL_OK")
</pallas_src>

<mosaic_0001>
module attributes {stable_mosaic.version = 11 : i64} {
  func.func @_sparse_linear_kernel(%arg0: i32, %arg1: i32, %arg2: memref<16x8xi32, #tpu.memory_space<vmem>>, %arg3: memref<16x8xf32, #tpu.memory_space<vmem>>, %arg4: memref<256x128xf32, #tpu.memory_space<vmem>>, %arg5: memref<16x128xf32, #tpu.memory_space<vmem>>, %arg6: memref<16x128xf32, #tpu.memory_space<vmem>>) attributes {dimension_semantics = [#tpu.dimension_semantics<parallel>, #tpu.dimension_semantics<arbitrary>], iteration_bounds = array<i64: 2, 1>, scalar_prefetch = 0 : i64, scratch_operands = 1 : i64, tpu.core_type = #tpu.core_type<tc>, window_params = [{transform_indices = @transform_0, window_bounds = array<i64: 16, 8>}, {transform_indices = @transform_1, window_bounds = array<i64: 16, 8>}, {transform_indices = @transform_2, window_bounds = array<i64: 256, 128>}, {transform_indices = @transform_3, window_bounds = array<i64: 16, 128>}]} {
    %c0_i32 = arith.constant 0 : i32
    %0 = arith.cmpi eq, %arg1, %c0_i32 : i32
    %1 = arith.extui %0 : i1 to i32
    %c0_i32_0 = arith.constant 0 : i32
    %2 = arith.cmpi ne, %1, %c0_i32_0 : i32
    scf.if %2 {
      %cst_34 = arith.constant 0.000000e+00 : f32
      %104 = vector.broadcast %cst_34 : f32 to vector<16x128xf32>
      %c0_35 = arith.constant 0 : index
      %c0_36 = arith.constant 0 : index
      %105 = vector.load %arg6[%c0_35, %c0_36] : memref<16x128xf32, #tpu.memory_space<vmem>>, vector<16x128xf32>
      tpu.vector_store %arg6[%c0_35, %c0_36], %104 {strides = array<i32>} : memref<16x128xf32, #tpu.memory_space<vmem>>, vector<16x128xf32>,
    } else {
    }
    %c256_i32 = arith.constant 256 : i32
    %3 = arith.muli %arg1, %c256_i32 : i32
    %4 = tpu.iota {dimensions = array<i32: 1>} : vector<16x256xi32>
    %5 = vector.broadcast %3 : i32 to vector<16x256xi32>
    %6 = arith.addi %4, %5 : vector<16x256xi32>
    %cst = arith.constant 0.000000e+00 : f32
    %7 = vector.broadcast %cst : f32 to vector<16x256xf32>
    %c0_i32_1 = arith.constant 0 : i32
    %c0 = arith.constant 0 : index
    %8 = arith.index_cast %c0_i32_1 : i32 to index
    %9 = vector.load %arg2[%c0, %8] : memref<16x8xi32, #tpu.memory_space<vmem>>, vector<16x1xi32>
    %c0_2 = arith.constant 0 : index
    %10 = arith.index_cast %c0_i32_1 : i32 to index
    %11 = vector.load %arg3[%c0_2, %10] : memref<16x8xf32, #tpu.memory_space<vmem>>, vector<16x1xf32>
    %12 = vector.broadcast %9 : vector<16x1xi32> to vector<16x256xi32>
    %13 = arith.cmpi eq, %12, %6 : vector<16x256xi32>
    %cst_3 = arith.constant 0.000000e+00 : f32
    %14 = vector.shape_cast %11 : vector<16x1xf32> to vector<16x1xf32>
    %15 = vector.broadcast %14 : vector<16x1xf32> to vector<16x256xf32>
    %16 = vector.broadcast %cst_3 : f32 to vector<16x256xf32>
    %17 = arith.select %13, %15, %16 : vector<16x256xi1>, vector<16x256xf32>
    %18 = arith.addf %7, %17 : vector<16x256xf32>
    %c1_i32 = arith.constant 1 : i32
    %c0_4 = arith.constant 0 : index
    %19 = arith.index_cast %c1_i32 : i32 to index
    %20 = vector.load %arg2[%c0_4, %19] : memref<16x8xi32, #tpu.memory_space<vmem>>, vector<16x1xi32>
    %c0_5 = arith.constant 0 : index
    %21 = arith.index_cast %c1_i32 : i32 to index
    %22 = vector.load %arg3[%c0_5, %21] : memref<16x8xf32, #tpu.memory_space<vmem>>, vector<16x1xf32>
    %23 = vector.broadcast %20 : vector<16x1xi32> to vector<16x256xi32>
    %24 = arith.cmpi eq, %23, %6 : vector<16x256xi32>
    %cst_6 = arith.constant 0.000000e+00 : f32
    %25 = vector.shape_cast %22 : vector<16x1xf32> to vector<16x1xf32>
    %26 = vector.broadcast %25 : vector<16x1xf32> to vector<16x256xf32>
    %27 = vector.broadcast %cst_6 : f32 to vector<16x256xf32>
    %28 = arith.select %24, %26, %27 : vector<16x256xi1>, vector<16x256xf32>
    %29 = arith.addf %18, %28 : vector<16x256xf32>
    %c2_i32 = arith.constant 2 : i32
    %c0_7 = arith.constant 0 : index
    %30 = arith.index_cast %c2_i32 : i32 to index
    %31 = vector.load %arg2[%c0_7, %30] : memref<16x8xi32, #tpu.memory_space<vmem>>, vector<16x1xi32>
    %c0_8 = arith.constant 0 : index
    %32 = arith.index_cast %c2_i32 : i32 to index
    %33 = vector.load %arg3[%c0_8, %32] : memref<16x8xf32, #tpu.memory_space<vmem>>, vector<16x1xf32>
    %34 = vector.broadcast %31 : vector<16x1xi32> to vector<16x256xi32>
    %35 = arith.cmpi eq, %34, %6 : vector<16x256xi32>
    %cst_9 = arith.constant 0.000000e+00 : f32
    %36 = vector.shape_cast %33 : vector<16x1xf32> to vector<16x1xf32>
    %37 = vector.broadcast %36 : vector<16x1xf32> to vector<16x256xf32>
    %38 = vector.broadcast %cst_9 : f32 to vector<16x256xf32>
    %39 = arith.select %35, %37, %38 : vector<16x256xi1>, vector<16x256xf32>
    %40 = arith.addf %29, %39 : vector<16x256xf32>
    %c3_i32 = arith.constant 3 : i32
    %c0_10 = arith.constant 0 : index
    %41 = arith.index_cast %c3_i32 : i32 to index
    %42 = vector.load %arg2[%c0_10, %41] : memref<16x8xi32, #tpu.memory_space<vmem>>, vector<16x1xi32>
    %c0_11 = arith.constant 0 : index
    %43 = arith.index_cast %c3_i32 : i32 to index
    %44 = vector.load %arg3[%c0_11, %43] : memref<16x8xf32, #tpu.memory_space<vmem>>, vector<16x1xf32>
    %45 = vector.broadcast %42 : vector<16x1xi32> to vector<16x256xi32>
    %46 = arith.cmpi eq, %45, %6 : vector<16x256xi32>
    %cst_12 = arith.constant 0.000000e+00 : f32
    %47 = vector.shape_cast %44 : vector<16x1xf32> to vector<16x1xf32>
    %48 = vector.broadcast %47 : vector<16x1xf32> to vector<16x256xf32>
    %49 = vector.broadcast %cst_12 : f32 to vector<16x256xf32>
    %50 = arith.select %46, %48, %49 : vector<16x256xi1>, vector<16x256xf32>
    %51 = arith.addf %40, %50 : vector<16x256xf32>
    %c4_i32 = arith.constant 4 : i32
    %c0_13 = arith.constant 0 : index
    %52 = arith.index_cast %c4_i32 : i32 to index
    %53 = vector.load %arg2[%c0_13, %52] : memref<16x8xi32, #tpu.memory_space<vmem>>, vector<16x1xi32>
    %c0_14 = arith.constant 0 : index
    %54 = arith.index_cast %c4_i32 : i32 to index
    %55 = vector.load %arg3[%c0_14, %54] : memref<16x8xf32, #tpu.memory_space<vmem>>, vector<16x1xf32>
    %56 = vector.broadcast %53 : vector<16x1xi32> to vector<16x256xi32>
    %57 = arith.cmpi eq, %56, %6 : vector<16x256xi32>
    %cst_15 = arith.constant 0.000000e+00 : f32
    %58 = vector.shape_cast %55 : vector<16x1xf32> to vector<16x1xf32>
    %59 = vector.broadcast %58 : vector<16x1xf32> to vector<16x256xf32>
    %60 = vector.broadcast %cst_15 : f32 to vector<16x256xf32>
    %61 = arith.select %57, %59, %60 : vector<16x256xi1>, vector<16x256xf32>
    %62 = arith.addf %51, %61 : vector<16x256xf32>
    %c5_i32 = arith.constant 5 : i32
    %c0_16 = arith.constant 0 : index
    %63 = arith.index_cast %c5_i32 : i32 to index
    %64 = vector.load %arg2[%c0_16, %63] : memref<16x8xi32, #tpu.memory_space<vmem>>, vector<16x1xi32>
    %c0_17 = arith.constant 0 : index
    %65 = arith.index_cast %c5_i32 : i32 to index
    %66 = vector.load %arg3[%c0_17, %65] : memref<16x8xf32, #tpu.memory_space<vmem>>, vector<16x1xf32>
    %67 = vector.broadcast %64 : vector<16x1xi32> to vector<16x256xi32>
    %68 = arith.cmpi eq, %67, %6 : vector<16x256xi32>
    %cst_18 = arith.constant 0.000000e+00 : f32
    %69 = vector.shape_cast %66 : vector<16x1xf32> to vector<16x1xf32>
    %70 = vector.broadcast %69 : vector<16x1xf32> to vector<16x256xf32>
    %71 = vector.broadcast %cst_18 : f32 to vector<16x256xf32>
    %72 = arith.select %68, %70, %71 : vector<16x256xi1>, vector<16x256xf32>
    %73 = arith.addf %62, %72 : vector<16x256xf32>
    %c6_i32 = arith.constant 6 : i32
    %c0_19 = arith.constant 0 : index
    %74 = arith.index_cast %c6_i32 : i32 to index
    %75 = vector.load %arg2[%c0_19, %74] : memref<16x8xi32, #tpu.memory_space<vmem>>, vector<16x1xi32>
    %c0_20 = arith.constant 0 : index
    %76 = arith.index_cast %c6_i32 : i32 to index
    %77 = vector.load %arg3[%c0_20, %76] : memref<16x8xf32, #tpu.memory_space<vmem>>, vector<16x1xf32>
    %78 = vector.broadcast %75 : vector<16x1xi32> to vector<16x256xi32>
    %79 = arith.cmpi eq, %78, %6 : vector<16x256xi32>
    %cst_21 = arith.constant 0.000000e+00 : f32
    %80 = vector.shape_cast %77 : vector<16x1xf32> to vector<16x1xf32>
    %81 = vector.broadcast %80 : vector<16x1xf32> to vector<16x256xf32>
    %82 = vector.broadcast %cst_21 : f32 to vector<16x256xf32>
    %83 = arith.select %79, %81, %82 : vector<16x256xi1>, vector<16x256xf32>
    %84 = arith.addf %73, %83 : vector<16x256xf32>
    %c7_i32 = arith.constant 7 : i32
    %c0_22 = arith.constant 0 : index
    %85 = arith.index_cast %c7_i32 : i32 to index
    %86 = vector.load %arg2[%c0_22, %85] : memref<16x8xi32, #tpu.memory_space<vmem>>, vector<16x1xi32>
    %c0_23 = arith.constant 0 : index
    %87 = arith.index_cast %c7_i32 : i32 to index
    %88 = vector.load %arg3[%c0_23, %87] : memref<16x8xf32, #tpu.memory_space<vmem>>, vector<16x1xf32>
    %89 = vector.broadcast %86 : vector<16x1xi32> to vector<16x256xi32>
    %90 = arith.cmpi eq, %89, %6 : vector<16x256xi32>
    %cst_24 = arith.constant 0.000000e+00 : f32
    %91 = vector.shape_cast %88 : vector<16x1xf32> to vector<16x1xf32>
    %92 = vector.broadcast %91 : vector<16x1xf32> to vector<16x256xf32>
    %93 = vector.broadcast %cst_24 : f32 to vector<16x256xf32>
    %94 = arith.select %90, %92, %93 : vector<16x256xi1>, vector<16x256xf32>
    %95 = arith.addf %84, %94 : vector<16x256xf32>
    %c8_i32 = arith.constant 8 : i32
    %c0_25 = arith.constant 0 : index
    %c0_26 = arith.constant 0 : index
    %96 = vector.load %arg4[%c0_25, %c0_26] : memref<256x128xf32, #tpu.memory_space<vmem>>, vector<256x128xf32>
    %c0_27 = arith.constant 0 : index
    %c0_28 = arith.constant 0 : index
    %97 = vector.load %arg6[%c0_27, %c0_28] : memref<16x128xf32, #tpu.memory_space<vmem>>, vector<16x128xf32>
    %cst_29 = arith.constant dense<0.000000e+00> : vector<16x128xf32>
    %98 = tpu.matmul %95, %96, %cst_29 {dimension_numbers = #tpu.dot_dimension_numbers<[1], [0], [0], [1], [0, 0, 1, 1], [], []>} : vector<16x256xf32>, vector<256x128xf32>, vector<16x128xf32> -> vector<16x128xf32>
    %99 = arith.addf %97, %98 : vector<16x128xf32>
    %c0_30 = arith.constant 0 : index
    %c0_31 = arith.constant 0 : index
    %100 = vector.load %arg6[%c0_30, %c0_31] : memref<16x128xf32, #tpu.memory_space<vmem>>, vector<16x128xf32>
    tpu.vector_store %arg6[%c0_30, %c0_31], %99 {strides = array<i32>} : memref<16x128xf32, #tpu.memory_space<vmem>>, vector<16x128xf32>,
    %c0_i32_32 = arith.constant 0 : i32
    %101 = arith.cmpi eq, %arg1, %c0_i32_32 : i32
    %102 = arith.extui %101 : i1 to i32
    %c0_i32_33 = arith.constant 0 : i32
    %103 = arith.cmpi ne, %102, %c0_i32_33 : i32
    scf.if %103 {
      %c0_34 = arith.constant 0 : index
      %c0_35 = arith.constant 0 : index
      %104 = vector.load %arg6[%c0_34, %c0_35] : memref<16x128xf32, #tpu.memory_space<vmem>>, vector<16x128xf32>
      %c0_36 = arith.constant 0 : index
      %c0_37 = arith.constant 0 : index
      %105 = vector.load %arg5[%c0_36, %c0_37] : memref<16x128xf32, #tpu.memory_space<vmem>>, vector<16x128xf32>
      tpu.vector_store %arg5[%c0_36, %c0_37], %104 {strides = array<i32>} : memref<16x128xf32, #tpu.memory_space<vmem>>, vector<16x128xf32>,
    } else {
    }
    return
  }
  func.func @transform_0(%arg0: i32, %arg1: i32) -> (i32, i32) {
    %c0_i32 = arith.constant 0 : i32
    %c0_i32_0 = arith.constant 0 : i32
    return %arg0, %c0_i32 : i32, i32
  }
  func.func @transform_1(%arg0: i32, %arg1: i32) -> (i32, i32) {
    %c0_i32 = arith.constant 0 : i32
    %c0_i32_0 = arith.constant 0 : i32
    return %arg0, %c0_i32 : i32, i32
  }
  func.func @transform_2(%arg0: i32, %arg1: i32) -> (i32, i32) {
    %c0_i32 = arith.constant 0 : i32
    %c0_i32_0 = arith.constant 0 : i32
    return %arg1, %c0_i32 : i32, i32
  }
  func.func @transform_3(%arg0: i32, %arg1: i32) -> (i32, i32) {
    %c0_i32 = arith.constant 0 : i32
    %c0_i32_0 = arith.constant 0 : i32
    return %arg0, %c0_i32 : i32, i32
  }
}

</mosaic_0001>

<llo_original>
// kernel: tpu_custom_call.1
$region0: #{tpu_custom_call.1}
  #allocation0 [shape = 'u32[]', space=smem, size = 0x4, offset = 0x4, fixed_abs, tag = 'smem constant byte address 0x4 - core index']
  #allocation1 [shape = 'u32[144,128]{1,0:T(1,128)}', space=vmem, size = 0x12000, scoped, tag = 'internal scratch']
  #allocation2 [shape = 'f32[16,128]{1,0:T(8,128)}', space=vmem, size = 0x2000, scoped, tag = 'scratch operand']
  %s0 = inlined_call_operand.vmem [shape: s32[32,8], index: 0, kind: input, shape index: {}]
  %s1 = inlined_call_operand.vmem [shape: f32[32,8], index: 1, kind: input, shape index: {}]
  %s2 = inlined_call_operand.hbm [shape: f32[256,128], index: 2, kind: input, shape index: {}]
  %s3 = inlined_call_operand.hbm [shape: f32[32,128], index: 3, kind: output, shape index: {}]
  %s4 = sld [smem:[#allocation0]]
  $region57: #{tpu_custom_call.1} parent=0
    _
  %s6 = ssub.s32 1, %s4
  %s7 = scalar_select 0, %s6, %s4
  $region1: #{tpu_custom_call.1} parent=0
    #allocation3 [shape = 'u8[131072]{0}', space=vmem, size = 0x20000, scoped, tag = 'input window, operand 2, single buffered']
    #allocation4 [shape = 's32[2]{0}', space=sflag, size = 0x8, scoped, tag = 'scoped memory for tpu_custom_call.1']
    #allocation5 [shape = 's32[2]{0}', space=sflag, size = 0x8, scoped, tag = 'scoped memory for tpu_custom_call.1']
    #allocation6 [shape = 'u8[16384]{0}', space=vmem, size = 0x4000, scoped, tag = 'output window, operand 0']
    %8 = vsyncpa [#allocation4], 0
    %9 = vsyncpa [#allocation5], 0
    %s10 = scalar_lea.sflag [#allocation5], 1
    %11 = vsyncpa %s10, 0
    loop: start=0, step=1, limit=4
    $region2: #{tpu_custom_call.1} parent=1 // loop_pre_header
      _
    $region3: #{tpu_custom_call.1} parent=1 // loop_header
      %s13 = sphi 0, %s17
      %p14 = scmp.ge.s32.totalorder %s13, 4
      %s20 = sphi 0, %s32
      %s21 = sphi 0, %s28
      %s22 = sphi 0, %s20
      %s23 = sphi 0, %s21
      %s24 = sphi 0, %s22
      %s25 = sphi 0, %s23
      %s35 = sphi 0, %s37
      %s38 = sphi 0, %s35
      %s39 = sphi 0, %s38
      %s55 = sphi 0, %s39
      %s61 = sphi 0, %s63
      %s64 = sphi 0, %s61
      %s65 = sphi 0, %s64
      %s81 = sphi 0, %s65
      %s87 = sphi 0, %s89
      %s90 = sphi 0, %s87
      %s91 = sphi 0, %s90
      %s107 = sphi 0, %s91
      %s113 = sphi 0, %s115
      %s116 = sphi 0, %s113
      %s117 = sphi 0, %s116
      %s133 = sphi 0, %s117
    $region4: #{tpu_custom_call.1} parent=1 // loop_header_branch
      %16 = sbr.rel (%p14) target = $region8
    $region5: #{tpu_custom_call.1} parent=1 // loop_body
      %s18 = ssub.s32 %s13, 1
      %s19 = ssub.s32 %s13, 2
      %s26 = sadd.s32 1, %s21
      %p27 = scmp.ge.s32.totalorder %s26, 1
      %s28 = scalar_select %p27, 0, %s26
      %s29 = sadd.s32 1, %s20
      %s30 = scalar_select %p27, %s29, %s20
      %p31 = scmp.ge.s32.totalorder %s30, 2
      %s32 = scalar_select %p31, 0, %s30
      %s33 = ssub.s32 %s20, %s32
      %p34 = scmp.eq.s32.totalorder %s33, 0
      %s36 = sadd.s32 %s35, 1
      %s37 = scalar_select %p34, %s35, %s36
      %p40 = pneg %p34
      %p41 = scmp.eq.s32.totalorder %s13, 1
      %p42 = por %p40, %p41
      %p43 = scmp.ne.s32.totalorder %s35, %s38
      %p44 = scmp.eq.s32.totalorder %s13, 0
      %p45 = por %p43, %p44
      %p46 = scmp.ne.s32.totalorder %s35, %s38
      %p47 = scmp.eq.s32.totalorder %s18, 1
      %p48 = por %p46, %p47
      %p49 = scmp.ne.s32.totalorder %s38, %s39
      %p50 = scmp.eq.s32.totalorder %s18, 0
      %p51 = por %p49, %p50
      %p52 = scmp.ne.s32.totalorder %s38, %s39
      %p53 = scmp.eq.s32.totalorder %s19, 1
      %p54 = por %p52, %p53
      %p56 = scmp.ne.s32.totalorder %s39, %s55
      %p57 = scmp.eq.s32.totalorder %s19, 0
      %p58 = por %p56, %p57
      %s59 = ssub.s32 %s20, %s32
      %p60 = scmp.eq.s32.totalorder %s59, 0
      %s62 = sadd.s32 %s61, 1
      %s63 = scalar_select %p60, %s61, %s62
      %p66 = pneg %p60
      %p67 = scmp.eq.s32.totalorder %s13, 1
      %p68 = por %p66, %p67
      %p69 = scmp.ne.s32.totalorder %s61, %s64
      %p70 = scmp.eq.s32.totalorder %s13, 0
      %p71 = por %p69, %p70
      %p72 = scmp.ne.s32.totalorder %s61, %s64
      %p73 = scmp.eq.s32.totalorder %s18, 1
      %p74 = por %p72, %p73
      %p75 = scmp.ne.s32.totalorder %s64, %s65
      %p76 = scmp.eq.s32.totalorder %s18, 0
      %p77 = por %p75, %p76
      %p78 = scmp.ne.s32.totalorder %s64, %s65
      %p79 = scmp.eq.s32.totalorder %s19, 1
      %p80 = por %p78, %p79
      %p82 = scmp.ne.s32.totalorder %s65, %s81
      %p83 = scmp.eq.s32.totalorder %s19, 0
      %p84 = por %p82, %p83
      %s85 = ssub.s32 %s21, %s28
      %p86 = scmp.eq.s32.totalorder %s85, 0
      %s88 = sadd.s32 %s87, 1
      %s89 = scalar_select %p86, %s87, %s88
      %p92 = pneg %p86
      %p93 = scmp.eq.s32.totalorder %s13, 1
      %p94 = por %p92, %p93
      %p95 = scmp.ne.s32.totalorder %s87, %s90
      %p96 = scmp.eq.s32.totalorder %s13, 0
      %p97 = por %p95, %p96
      %p98 = scmp.ne.s32.totalorder %s87, %s90
      %p99 = scmp.eq.s32.totalorder %s18, 1
      %p100 = por %p98, %p99
      %p101 = scmp.ne.s32.totalorder %s90, %s91
      %p102 = scmp.eq.s32.totalorder %s18, 0
      %p103 = por %p101, %p102
      %p104 = scmp.ne.s32.totalorder %s90, %s91
      %p105 = scmp.eq.s32.totalorder %s19, 1
      %p106 = por %p104, %p105
      %p108 = scmp.ne.s32.totalorder %s91, %s107
      %p109 = scmp.eq.s32.totalorder %s19, 0
      %p110 = por %p108, %p109
      %s111 = ssub.s32 %s20, %s32
      %p112 = scmp.eq.s32.totalorder %s111, 0
      %s114 = sadd.s32 %s113, 1
      %s115 = scalar_select %p112, %s113, %s114
      %p118 = pneg %p112
      %p119 = scmp.eq.s32.totalorder %s13, 1
      %p120 = por %p118, %p119
      %p121 = scmp.ne.s32.totalorder %s113, %s116
      %p122 = scmp.eq.s32.totalorder %s13, 0
      %p123 = por %p121, %p122
      %p124 = scmp.ne.s32.totalorder %s113, %s116
      %p125 = scmp.eq.s32.totalorder %s18, 1
      %p126 = por %p124, %p125
      %p127 = scmp.ne.s32.totalorder %s116, %s117
      %p128 = scmp.eq.s32.totalorder %s18, 0
      %p129 = por %p127, %p128
      %p130 = scmp.ne.s32.totalorder %s116, %s117
      %p131 = scmp.eq.s32.totalorder %s19, 1
      %p132 = por %p130, %p131
      %p134 = scmp.ne.s32.totalorder %s117, %s133
      %p135 = scmp.eq.s32.totalorder %s19, 0
      %p136 = por %p134, %p135
      %p137 = scmp.le.s32.totalorder 1, %s13
      %p138 = scmp.lt.s32.totalorder %s13, 3
      %p139 = pnand %p137, %p138
      %p140 = pneg %p139
      // Predicated region
      $region9: #{tpu_custom_call.1} parent=5 // pred_check
        _
      $region10: #{tpu_custom_call.1} parent=5 // pred_check_branch
        %142 = sbr.rel (%p139) target = $region12
      $region11: #{tpu_custom_call.1} parent=5 // pred_region
        %s143 = ssub.s32 %s13, 1
        // Predicated region
        $region13: #{tpu_custom_call.1} parent=11 // pred_check
          %p144 = pneg %p103
        $region14: #{tpu_custom_call.1} parent=11 // pred_check_branch
          %146 = sbr.rel (%p144) target = $region16
        $region15: #{tpu_custom_call.1} parent=11 // pred_region
          %s147 = smul.u32 32, %s23
          %s149 = ssub.s32 4096, 4096
          %150 = vsyncadd [#allocation4], %s149
          %s151 = smul.addr %s147, 128
          %s152 = scalar_lea.hbm %s2, %s151
          %s153 = sshll.u32 [#allocation3], 4
          %s154 = int_to_ptr.vmem [resolvable:$true] %s153
          %159 = dma.hbm_to_vmem [thread:$0]  %s152, 4096, %s154, [#allocation4], 128, 128, 8
        $region16: #{tpu_custom_call.1} parent=11 // pred_fallthru
          _
      $region12: #{tpu_custom_call.1} parent=5 // pred_fallthru
        _
      %p160 = scmp.lt.s32.totalorder %s13, 2
      // Predicated region
      $region17: #{tpu_custom_call.1} parent=5 // pred_check
        %p161 = pneg %p160
      $region18: #{tpu_custom_call.1} parent=5 // pred_check_branch
        %163 = sbr.rel (%p161) target = $region20
      $region19: #{tpu_custom_call.1} parent=5 // pred_region
        // Predicated region
        $region21: #{tpu_custom_call.1} parent=19 // pred_check
          %p164 = pneg %p45
        $region22: #{tpu_custom_call.1} parent=19 // pred_check_branch
          %166 = sbr.rel (%p164) target = $region24
        $region23: #{tpu_custom_call.1} parent=19 // pred_region
          %s167 = smul.u32 2, %s20
          %p168 = scmp.lt.s32.totalorder %s167, 3
          %s169 = scalar_select %p168, %s167, 3
          %s170 = smul.addr %s169, 8
          %s171 = scalar_lea.vmem %s0, %s170
          %s172 = smul.u32 2, %s20
        $region24: #{tpu_custom_call.1} parent=19 // pred_fallthru
          _
        // Predicated region
        $region25: #{tpu_custom_call.1} parent=19 // pred_check
          %p173 = pneg %p71
        $region26: #{tpu_custom_call.1} parent=19 // pred_check_branch
          %175 = sbr.rel (%p173) target = $region28
        $region27: #{tpu_custom_call.1} parent=19 // pred_region
          %s176 = smul.u32 2, %s20
          %p177 = scmp.lt.s32.totalorder %s176, 3
          %s178 = scalar_select %p177, %s176, 3
          %s179 = smul.addr %s178, 8
          %s180 = scalar_lea.vmem %s1, %s179
          %s181 = smul.u32 2, %s20
        $region28: #{tpu_custom_call.1} parent=19 // pred_fallthru
          _
      $region20: #{tpu_custom_call.1} parent=5 // pred_fallthru
        _
      %p182 = scmp.le.s32.totalorder 1, %s13
      %p183 = scmp.lt.s32.totalorder %s13, 3
      %p184 = pnand %p182, %p183
      %p185 = pneg %p184
      // Predicated region
      $region29: #{tpu_custom_call.1} parent=5 // pred_check
        _
      $region30: #{tpu_custom_call.1} parent=5 // pred_check_branch
        %187 = sbr.rel (%p184) target = $region32
      $region31: #{tpu_custom_call.1} parent=5 // pred_region
        %s188 = ssub.s32 %s13, 1
        // Predicated region
        $region33: #{tpu_custom_call.1} parent=31 // pred_check
          %p189 = pneg %p103
        $region34: #{tpu_custom_call.1} parent=31 // pred_check_branch
          %191 = sbr.rel (%p189) target = $region36
        $region35: #{tpu_custom_call.1} parent=31 // pred_region
          %192 = dma.done [#allocation4], 4096
        $region36: #{tpu_custom_call.1} parent=31 // pred_fallthru
          _
        %s193 = smul.u32 2, %s22
        %p194 = scmp.lt.s32.totalorder %s193, 3
        %s195 = scalar_select %p194, %s193, 3
        %s196 = smul.addr %s195, 8
        %s197 = scalar_lea.vmem %s0, %s196
        %p198 = pneg %p51
        %p199 = pneg %p48
        %s200 = smul.u32 2, %s22
        %p201 = scmp.lt.s32.totalorder %s200, 3
        %s202 = scalar_select %p201, %s200, 3
        %s203 = smul.addr %s202, 8
        %s204 = scalar_lea.vmem %s1, %s203
        %p205 = pneg %p77
        %p206 = pneg %p74
        %p207 = pneg %p103
        %p208 = pneg %p100
        %p209 = pneg %p129
        %p210 = pneg %p126
        %s211 = sand.u32 %s116, 1
        %s212 = scalar_lea.sflag [#allocation5], %s211
        %s213 = sand.u32 %s116, 1
        %s214 = smul.addr %s213, 16
        %s215 = scalar_lea.vmem [#allocation6], %s214
        %s216 = smul.u32 2, %s22
        %p217 = scmp.lt.s32.totalorder %s216, 3
        %s218 = scalar_select %p217, %s216, 3
        %s219 = smul.addr %s218, 8
        %s220 = scalar_lea.vmem %s0, %s219
        %s221 = smul.u32 2, %s22
        %s222 = smul.u32 2, %s22
        %p223 = scmp.lt.s32.totalorder %s222, 3
        %s224 = scalar_select %p223, %s222, 3
        %s225 = smul.addr %s224, 8
        %s226 = scalar_lea.vmem %s1, %s225
        %s227 = smul.u32 2, %s22
        %s228 = smul.u32 32, %s23
        %s229 = smul.u32 2, %s22
        %p230 = scmp.eq.s32.totalorder %s23, 0
        // Predicated region
        $region37: #{tpu_custom_call.1} parent=31 // pred_check
          %p231 = pneg %p230
        $region38: #{tpu_custom_call.1} parent=31 // pred_check_branch
          %233 = sbr.rel (%p231) target = $region40
        $region39: #{tpu_custom_call.1} parent=31 // pred_region
          %234 = vst [vmem:[#allocation2] sm:$0xff] 0.0
          %235 = vst [vmem:[#allocation2 + $0x8] sm:$0xff] 0.0
        $region40: #{tpu_custom_call.1} parent=31 // pred_fallthru
          _
        %s236 = smul.u32 %s23, 256
        %v237 = vlaneseq
        %v238 = vand.u32 %v237, 127
        %v239 = vadd.s32 %v238, 128
        %v240 = vstv %s236
        %v241 = vadd.s32 %v238, %v240
        %v242 = vadd.s32 %v239, %v240
        %v243 = vld [vmem:[%s220] sm:$0xff]
        %v244 = vld [vmem:[%s220 + $0x8] sm:$0xff]
        %v245 = vld [vmem:[%s226] sm:$0xff]
        %v246 = vld [vmem:[%s226 + $0x8] sm:$0xff]
        %247 = vset.pattern.permute.xlu0 0
        %248 = vperm.xlu0 %247, %v243
        %v249 = vpop.permute.xlu0 %248
        %250 = vset.pattern.permute.xlu0 0
        %251 = vperm.xlu0 %250, %v244
        %v252 = vpop.permute.xlu0 %251
        %vm253 = vcmp.eq.s32.totalorder %v249, %v241
        %vm254 = vcmp.eq.s32.totalorder %v249, %v242
        %vm255 = vcmp.eq.s32.totalorder %v252, %v241
        %vm256 = vcmp.eq.s32.totalorder %v252, %v242
        %258 = vset.pattern.permute.xlu0 0
        %259 = vperm.xlu0 %258, %v245
        %v260 = vpop.permute.xlu0 %259
        %263 = vset.pattern.permute.xlu0 0
        %264 = vperm.xlu0 %263, %v246
        %v265 = vpop.permute.xlu0 %264
        %v267 = vsel %vm253, %v260, 0.0
        %v268 = vsel %vm254, %v260, 0.0
        %v269 = vsel %vm255, %v265, 0.0
        %v270 = vsel %vm256, %v265, 0.0
        %v271 = vadd.f32 %v267, 0.0
        %v272 = vadd.f32 %v268, 0.0
        %v273 = vadd.f32 %v269, 0.0
        %v274 = vadd.f32 %v270, 0.0
        %275 = vset.pattern.permute.xlu0 1
        %276 = vperm.xlu0 %275, %v243
        %v277 = vpop.permute.xlu0 %276
        %278 = vset.pattern.permute.xlu0 1
        %279 = vperm.xlu0 %278, %v244
        %v280 = vpop.permute.xlu0 %279
        %vm281 = vcmp.eq.s32.totalorder %v277, %v241
        %vm282 = vcmp.eq.s32.totalorder %v277, %v242
        %vm283 = vcmp.eq.s32.totalorder %v280, %v241
        %vm284 = vcmp.eq.s32.totalorder %v280, %v242
        %285 = vset.pattern.permute.xlu0 1
        %286 = vperm.xlu0 %285, %v245
        %v287 = vpop.permute.xlu0 %286
        %289 = vset.pattern.permute.xlu0 1
        %290 = vperm.xlu0 %289, %v246
        %v291 = vpop.permute.xlu0 %290
        %v293 = vsel %vm281, %v287, 0.0
        %v294 = vsel %vm282, %v287, 0.0
        %v295 = vsel %vm283, %v291, 0.0
        %v296 = vsel %vm284, %v291, 0.0
        %v297 = vadd.f32 %v271, %v293
        %v298 = vadd.f32 %v272, %v294
        %v299 = vadd.f32 %v273, %v295
        %v300 = vadd.f32 %v274, %v296
        %301 = vset.pattern.permute.xlu0 2
        %302 = vperm.xlu0 %301, %v243
        %v303 = vpop.permute.xlu0 %302
        %304 = vset.pattern.permute.xlu0 2
        %305 = vperm.xlu0 %304, %v244
        %v306 = vpop.permute.xlu0 %305
        %vm307 = vcmp.eq.s32.totalorder %v303, %v241
        %vm308 = vcmp.eq.s32.totalorder %v303, %v242
        %vm309 = vcmp.eq.s32.totalorder %v306, %v241
        %vm310 = vcmp.eq.s32.totalorder %v306, %v242
        %311 = vset.pattern.permute.xlu0 2
        %312 = vperm.xlu0 %311, %v245
        %v313 = vpop.permute.xlu0 %312
        %315 = vset.pattern.permute.xlu0 2
        %316 = vperm.xlu0 %315, %v246
        %v317 = vpop.permute.xlu0 %316
        %v319 = vsel %vm307, %v313, 0.0
        %v320 = vsel %vm308, %v313, 0.0
        %v321 = vsel %vm309, %v317, 0.0
        %v322 = vsel %vm310, %v317, 0.0
        %v323 = vadd.f32 %v297, %v319
        %v324 = vadd.f32 %v298, %v320
        %v325 = vadd.f32 %v299, %v321
        %v326 = vadd.f32 %v300, %v322
        %327 = vset.pattern.permute.xlu0 3
        %328 = vperm.xlu0 %327, %v243
        %v329 = vpop.permute.xlu0 %328
        %330 = vset.pattern.permute.xlu0 3
        %331 = vperm.xlu0 %330, %v244
        %v332 = vpop.permute.xlu0 %331
        %vm333 = vcmp.eq.s32.totalorder %v329, %v241
        %vm334 = vcmp.eq.s32.totalorder %v329, %v242
        %vm335 = vcmp.eq.s32.totalorder %v332, %v241
        %vm336 = vcmp.eq.s32.totalorder %v332, %v242
        %337 = vset.pattern.permute.xlu0 3
        %338 = vperm.xlu0 %337, %v245
        %v339 = vpop.permute.xlu0 %338
        %341 = vset.pattern.permute.xlu0 3
        %342 = vperm.xlu0 %341, %v246
        %v343 = vpop.permute.xlu0 %342
        %v345 = vsel %vm333, %v339, 0.0
        %v346 = vsel %vm334, %v339, 0.0
        %v347 = vsel %vm335, %v343, 0.0
        %v348 = vsel %vm336, %v343, 0.0
        %v349 = vadd.f32 %v323, %v345
        %v350 = vadd.f32 %v324, %v346
        %v351 = vadd.f32 %v325, %v347
        %v352 = vadd.f32 %v326, %v348
        %353 = vset.pattern.permute.xlu0 4
        %354 = vperm.xlu0 %353, %v243
        %v355 = vpop.permute.xlu0 %354
        %356 = vset.pattern.permute.xlu0 4
        %357 = vperm.xlu0 %356, %v244
        %v358 = vpop.permute.xlu0 %357
        %vm359 = vcmp.eq.s32.totalorder %v355, %v241
        %vm360 = vcmp.eq.s32.totalorder %v355, %v242
        %vm361 = vcmp.eq.s32.totalorder %v358, %v241
        %vm362 = vcmp.eq.s32.totalorder %v358, %v242
        %363 = vset.pattern.permute.xlu0 4
        %364 = vperm.xlu0 %363, %v245
        %v365 = vpop.permute.xlu0 %364
        %367 = vset.pattern.permute.xlu0 4
        %368 = vperm.xlu0 %367, %v246
        %v369 = vpop.permute.xlu0 %368
        %v371 = vsel %vm359, %v365, 0.0
        %v372 = vsel %vm360, %v365, 0.0
        %v373 = vsel %vm361, %v369, 0.0
        %v374 = vsel %vm362, %v369, 0.0
        %v375 = vadd.f32 %v349, %v371
        %v376 = vadd.f32 %v350, %v372
        %v377 = vadd.f32 %v351, %v373
        %v378 = vadd.f32 %v352, %v374
        %379 = vset.pattern.permute.xlu0 5
        %380 = vperm.xlu0 %379, %v243
        %v381 = vpop.permute.xlu0 %380
        %382 = vset.pattern.permute.xlu0 5
        %383 = vperm.xlu0 %382, %v244
        %v384 = vpop.permute.xlu0 %383
        %vm385 = vcmp.eq.s32.totalorder %v381, %v241
        %vm386 = vcmp.eq.s32.totalorder %v381, %v242
        %vm387 = vcmp.eq.s32.totalorder %v384, %v241
        %vm388 = vcmp.eq.s32.totalorder %v384, %v242
        %389 = vset.pattern.permute.xlu0 5
        %390 = vperm.xlu0 %389, %v245
        %v391 = vpop.permute.xlu0 %390
        %393 = vset.pattern.permute.xlu0 5
        %394 = vperm.xlu0 %393, %v246
        %v395 = vpop.permute.xlu0 %394
        %v397 = vsel %vm385, %v391, 0.0
        %v398 = vsel %vm386, %v391, 0.0
        %v399 = vsel %vm387, %v395, 0.0
        %v400 = vsel %vm388, %v395, 0.0
        %v401 = vadd.f32 %v375, %v397
        %v402 = vadd.f32 %v376, %v398
        %v403 = vadd.f32 %v377, %v399
        %v404 = vadd.f32 %v378, %v400
        %405 = vset.pattern.permute.xlu0 6
        %406 = vperm.xlu0 %405, %v243
        %v407 = vpop.permute.xlu0 %406
        %408 = vset.pattern.permute.xlu0 6
        %409 = vperm.xlu0 %408, %v244
        %v410 = vpop.permute.xlu0 %409
        %vm411 = vcmp.eq.s32.totalorder %v407, %v241
        %vm412 = vcmp.eq.s32.totalorder %v407, %v242
        %vm413 = vcmp.eq.s32.totalorder %v410, %v241
        %vm414 = vcmp.eq.s32.totalorder %v410, %v242
        %415 = vset.pattern.permute.xlu0 6
        %416 = vperm.xlu0 %415, %v245
        %v417 = vpop.permute.xlu0 %416
        %419 = vset.pattern.permute.xlu0 6
        %420 = vperm.xlu0 %419, %v246
        %v421 = vpop.permute.xlu0 %420
        %v423 = vsel %vm411, %v417, 0.0
        %v424 = vsel %vm412, %v417, 0.0
        %v425 = vsel %vm413, %v421, 0.0
        %v426 = vsel %vm414, %v421, 0.0
        %v427 = vadd.f32 %v401, %v423
        %v428 = vadd.f32 %v402, %v424
        %v429 = vadd.f32 %v403, %v425
        %v430 = vadd.f32 %v404, %v426
        %431 = vset.pattern.permute.xlu0 7
        %432 = vperm.xlu0 %431, %v243
        %v433 = vpop.permute.xlu0 %432
        %434 = vset.pattern.permute.xlu0 7
        %435 = vperm.xlu0 %434, %v244
        %v436 = vpop.permute.xlu0 %435
        %vm437 = vcmp.eq.s32.totalorder %v433, %v241
        %vm438 = vcmp.eq.s32.totalorder %v433, %v242
        %vm439 = vcmp.eq.s32.totalorder %v436, %v241
        %vm440 = vcmp.eq.s32.totalorder %v436, %v242
        %441 = vset.pattern.permute.xlu0 7
        %442 = vperm.xlu0 %441, %v245
        %v443 = vpop.permute.xlu0 %442
        %445 = vset.pattern.permute.xlu0 7
        %446 = vperm.xlu0 %445, %v246
        %v447 = vpop.permute.xlu0 %446
        %v449 = vsel %vm437, %v443, 0.0
        %v450 = vsel %vm438, %v443, 0.0
        %v451 = vsel %vm439, %v447, 0.0
        %v452 = vsel %vm440, %v447, 0.0
        %v453 = vadd.f32 %v427, %v449
        %v454 = vadd.f32 %v428, %v450
        %v455 = vadd.f32 %v429, %v451
        %v456 = vadd.f32 %v430, %v452
        %v457 = vld [vmem:[#allocation3] sm:$0xff]
        %v458 = vld [vmem:[#allocation3 + $0x8] sm:$0xff]
        %v459 = vld [vmem:[#allocation3 + $0x10] sm:$0xff]
        %v460 = vld [vmem:[#allocation3 + $0x18] sm:$0xff]
        %v461 = vld [vmem:[#allocation3 + $0x20] sm:$0xff]
        %v462 = vld [vmem:[#allocation3 + $0x28] sm:$0xff]
        %v463 = vld [vmem:[#allocation3 + $0x30] sm:$0xff]
        %v464 = vld [vmem:[#allocation3 + $0x38] sm:$0xff]
        %v465 = vld [vmem:[#allocation3 + $0x40] sm:$0xff]
        %v466 = vld [vmem:[#allocation3 + $0x48] sm:$0xff]
        %v467 = vld [vmem:[#allocation3 + $0x50] sm:$0xff]
        %v468 = vld [vmem:[#allocation3 + $0x58] sm:$0xff]
        %v469 = vld [vmem:[#allocation3 + $0x60] sm:$0xff]
        %v470 = vld [vmem:[#allocation3 + $0x68] sm:$0xff]
        %v471 = vld [vmem:[#allocation3 + $0x70] sm:$0xff]
        %v472 = vld [vmem:[#allocation3 + $0x78] sm:$0xff]
        %v473 = vld [vmem:[#allocation3 + $0x80] sm:$0xff]
        %v474 = vld [vmem:[#allocation3 + $0x88] sm:$0xff]
        %v475 = vld [vmem:[#allocation3 + $0x90] sm:$0xff]
        %v476 = vld [vmem:[#allocation3 + $0x98] sm:$0xff]
        %v477 = vld [vmem:[#allocation3 + $0xa0] sm:$0xff]
        %v478 = vld [vmem:[#allocation3 + $0xa8] sm:$0xff]
        %v479 = vld [vmem:[#allocation3 + $0xb0] sm:$0xff]
        %v480 = vld [vmem:[#allocation3 + $0xb8] sm:$0xff]
        %v481 = vld [vmem:[#allocation3 + $0xc0] sm:$0xff]
        %v482 = vld [vmem:[#allocation3 + $0xc8] sm:$0xff]
        %v483 = vld [vmem:[#allocation3 + $0xd0] sm:$0xff]
        %v484 = vld [vmem:[#allocation3 + $0xd8] sm:$0xff]
        %v485 = vld [vmem:[#allocation3 + $0xe0] sm:$0xff]
        %v486 = vld [vmem:[#allocation3 + $0xe8] sm:$0xff]
        %v487 = vld [vmem:[#allocation3 + $0xf0] sm:$0xff]
        %v488 = vld [vmem:[#allocation3 + $0xf8] sm:$0xff]
        %v489 = vld [vmem:[#allocation2] sm:$0xff]
        %v490 = vld [vmem:[#allocation2 + $0x8] sm:$0xff]
        %491 = vmatprep.subr.mxu0 0.0
        %492 = vmatpush1.msra.mxu0 %v472
        %493 = vmatprep.subr.mxu0 0.0
        %494 = vmatpush1.msra.mxu0 %v471
        %495 = vmatprep.subr.mxu0 0.0
        %496 = vmatpush1.msra.mxu0 %v470
        %497 = vmatprep.subr.mxu0 0.0
        %498 = vmatpush1.msra.mxu0 %v469
        %499 = vmatprep.subr.mxu0 0.0
        %500 = vmatpush1.msra.mxu0 %v468
        %501 = vmatprep.subr.mxu0 0.0
        %502 = vmatpush1.msra.mxu0 %v467
        %503 = vmatprep.subr.mxu0 0.0
        %504 = vmatpush1.msra.mxu0 %v466
        %505 = vmatprep.subr.mxu0 0.0
        %506 = vmatpush1.msra.mxu0 %v465
        %507 = vmatprep.subr.mxu0 0.0
        %508 = vmatpush1.msra.mxu0 %v464
        %509 = vmatprep.subr.mxu0 0.0
        %510 = vmatpush1.msra.mxu0 %v463
        %511 = vmatprep.subr.mxu0 0.0
        %512 = vmatpush1.msra.mxu0 %v462
        %513 = vmatprep.subr.mxu0 0.0
        %514 = vmatpush1.msra.mxu0 %v461
        %515 = vmatprep.subr.mxu0 0.0
        %516 = vmatpush1.msra.mxu0 %v460
        %517 = vmatprep.subr.mxu0 0.0
        %518 = vmatpush1.msra.mxu0 %v459
        %519 = vmatprep.subr.mxu0 0.0
        %520 = vmatpush1.msra.mxu0 %v458
        %521 = vmatprep.subr.mxu0 0.0
        %522 = vmatpush1.msra.mxu0 %v457
        %523 = vmatprep.subr.mxu0 0.0
        %524 = vmatpush2.msra.mxu0 %v488
        %525 = vmatprep.subr.mxu0 0.0
        %526 = vmatpush2.msra.mxu0 %v487
        %527 = vmatprep.subr.mxu0 0.0
        %528 = vmatpush2.msra.mxu0 %v486
        %529 = vmatprep.subr.mxu0 0.0
        %530 = vmatpush2.msra.mxu0 %v485
        %531 = vmatprep.subr.mxu0 0.0
        %532 = vmatpush2.msra.mxu0 %v484
        %533 = vmatprep.subr.mxu0 0.0
        %534 = vmatpush2.msra.mxu0 %v483
        %535 = vmatprep.subr.mxu0 0.0
        %536 = vmatpush2.msra.mxu0 %v482
        %537 = vmatprep.subr.mxu0 0.0
        %538 = vmatpush2.msra.mxu0 %v481
        %539 = vmatprep.subr.mxu0 0.0
        %540 = vmatpush2.msra.mxu0 %v480
        %541 = vmatprep.subr.mxu0 0.0
        %542 = vmatpush2.msra.mxu0 %v479
        %543 = vmatprep.subr.mxu0 0.0
        %544 = vmatpush2.msra.mxu0 %v478
        %545 = vmatprep.subr.mxu0 0.0
        %546 = vmatpush2.msra.mxu0 %v477
        %547 = vmatprep.subr.mxu0 0.0
        %548 = vmatpush2.msra.mxu0 %v476
        %549 = vmatprep.subr.mxu0 0.0
        %550 = vmatpush2.msra.mxu0 %v475
        %551 = vmatprep.subr.mxu0 0.0
        %552 = vmatpush2.msra.mxu0 %v474
        %553 = vmatprep.subr.mxu0 0.0
        %554 = vmatpush2.msra.mxu0 %v473
        %555 = vmatprep.mubr.f32.mxu0 %v454
        %556 = vmatmul.mubr.f32.gmra.mxu0 %v453
        %v557 = vpop.f32.mrf.mxu0
        %v558 = vadd.f32 0.0, %v557
        %v559 = vpop.f32.mrf.mxu0
        %560 = vmatprep.mubr.f32.mxu0 %v456
        %561 = vmatmul.mubr.f32.gmra.mxu0 %v455
        %v562 = vpop.f32.mrf.mxu0
        %v563 = vadd.f32 0.0, %v562
        %v564 = vpop.f32.mrf.mxu0
        %565 = vdwg.mxu0
        %v566 = vadd.f32 %v489, %v558
        %v567 = vadd.f32 %v490, %v563
        %568 = vst [vmem:[#allocation2] sm:$0xff] %v566
        %569 = vst [vmem:[#allocation2 + $0x8] sm:$0xff] %v567
        // Predicated region
        $region41: #{tpu_custom_call.1} parent=31 // pred_check
          %p570 = pneg %p230
        $region42: #{tpu_custom_call.1} parent=31 // pred_check_branch
          %572 = sbr.rel (%p570) target = $region44
        $region43: #{tpu_custom_call.1} parent=31 // pred_region
          %v573 = vld [vmem:[#allocation2] sm:$0xff]
          %v574 = vld [vmem:[#allocation2 + $0x8] sm:$0xff]
          %575 = vst [vmem:[%s215] sm:$0xff] %v573
          %576 = vst [vmem:[%s215 + $0x8] sm:$0xff] %v574
        $region44: #{tpu_custom_call.1} parent=31 // pred_fallthru
          _
        %s577 = sand.u32 %s116, 1
        %s578 = scalar_lea.sflag [#allocation5], %s577
        %s579 = sand.u32 %s116, 1
        %s580 = smul.addr %s579, 16
        %s581 = scalar_lea.vmem [#allocation6], %s580
        // Predicated region
        $region45: #{tpu_custom_call.1} parent=31 // pred_check
          %p582 = pneg %p126
        $region46: #{tpu_custom_call.1} parent=31 // pred_check_branch
          %584 = sbr.rel (%p582) target = $region48
        $region47: #{tpu_custom_call.1} parent=31 // pred_region
          %s585 = smul.u32 2, %s22
          %s587 = ssub.s32 256, 256
          %588 = vsyncadd %s578, %s587
          %s589 = smul.addr %s585, 128
          %s590 = scalar_lea.hbm %s3, %s589
          %s591 = sshll.u32 %s581, 4
          %s592 = int_to_ptr.vmem [resolvable:$true] %s591
          %597 = dma.vmem_to_hbm [thread:$0]  %s592, 256, %s590, %s578, 128, 128, 8
        $region48: #{tpu_custom_call.1} parent=31 // pred_fallthru
          _
      $region32: #{tpu_custom_call.1} parent=5 // pred_fallthru
        _
      %p598 = scmp.le.s32.totalorder 2, %s13
      // Predicated region
      $region49: #{tpu_custom_call.1} parent=5 // pred_check
        %p599 = pneg %p598
      $region50: #{tpu_custom_call.1} parent=5 // pred_check_branch
        %601 = sbr.rel (%p599) target = $region52
      $region51: #{tpu_custom_call.1} parent=5 // pred_region
        %s602 = ssub.s32 %s13, 2
        // Predicated region
        $region53: #{tpu_custom_call.1} parent=51 // pred_check
          %p603 = pneg %p132
        $region54: #{tpu_custom_call.1} parent=51 // pred_check_branch
          %605 = sbr.rel (%p603) target = $region56
        $region55: #{tpu_custom_call.1} parent=51 // pred_region
          %s606 = sand.u32 %s117, 1
          %s607 = scalar_lea.sflag [#allocation5], %s606
          %s608 = sand.u32 %s117, 1
          %s609 = smul.addr %s608, 16
          %s610 = scalar_lea.vmem [#allocation6], %s609
          %611 = dma.done %s607, 256
        $region56: #{tpu_custom_call.1} parent=51 // pred_fallthru
          _
      $region52: #{tpu_custom_call.1} parent=5 // pred_fallthru
        _
    $region6: #{tpu_custom_call.1} parent=1 // loop_footer
      %s17 = sadd.s32 1, %s13
    $region7: #{tpu_custom_call.1} parent=1 // loop_footer_branch
      %12 = sbr.rel target = $region3
    $region8: #{tpu_custom_call.1} parent=1 // loop_exit
      _
    %612 = vsyncpa [#allocation4], 1
    %s613 = scalar_lea.sflag [#allocation4], 1
    %614 = vsyncpa %s613, 1
    %615 = vsyncpa [#allocation5], 1
    %s616 = scalar_lea.sflag [#allocation5], 1
    %617 = vsyncpa %s616, 1

</llo_original>
